<compile_context>
chip_gen: v6e
topology: v6e:2x2x1
jax: 0.10.0
libtpu: 0.0.40
codegen_flags: <defaults>
</compile_context>

<pallas_src>
import functools

import jax
import jax.numpy as jnp
import numpy as np
from jax import lax
from jax.experimental import pallas as pl
from jax.experimental.pallas import tpu as pltpu


def _multiplex_attn_kernel(emb_ref, w_ref, b_ref, att_ref, out_ref, *,
                           num_layers, matmul_dtype):
    """One batch-tile of the MultiplexNodeAttention forward pass.

    emb_ref : (L, TB, E_pad)   w_ref : (E_pad, H_pad)
    b_ref   : (1, H_pad)       att_ref : (1, H_pad)     out_ref : (TB, H_pad)
    """
    L = num_layers
    TB = emb_ref.shape[1]
    E = emb_ref.shape[2]
    H = w_ref.shape[1]

    # --- 1. L2-normalize all layers at once (VPU mul + EUP rsqrt, no VALU divide) ---
    e = emb_ref[...]                                                      # (L, TB, E)
    inv_norm = lax.rsqrt(jnp.sum(e * e, axis=-1, keepdims=True) + 1e-12)
    e = e * inv_norm

    # --- 2. single fused MXU matmul: (L*TB, E) @ (E, H), f32 accumulation ---
    lhs = e.reshape(L * TB, E)          # free reshape: TB is a multiple of 8, E stays lane dim
    w = w_ref[...]
    if np.dtype(matmul_dtype) != np.dtype(jnp.float32):
        lhs = lhs.astype(matmul_dtype)
        w = w.astype(matmul_dtype)
    z = jnp.dot(lhs, w, preferred_element_type=jnp.float32)              # (L*TB, H) f32
    zl = z.reshape(L, TB, H)                                             # free split reshape

    # --- 3. attention logits + softmax over the layer axis ---
    bias = b_ref[...]                                                    # (1, H) -> one broadcast
    att = att_ref[...]                                                   # (1, H) -> one broadcast
    logits = jnp.sum(jnp.tanh(zl + bias) * att, axis=-1, keepdims=True)  # (L, TB, 1)
    s = logits - jnp.max(logits, axis=0, keepdims=True)
    es = jnp.exp(s)
    denom = jnp.sum(es, axis=0, keepdims=True)                           # (1, TB, 1)
    inv = pl.reciprocal(denom, approx=True)                              # EUP slot
    inv = inv * (2.0 - denom * inv)                                      # one Newton step -> ~f32 exact
    wsm = es * inv                                                       # (L, TB, 1) softmax weights

    # --- 4. weighted sum over layers: sum_l w_l * z_l ---
    out = jnp.sum(zl * wsm, axis=0)                                      # (TB, H)
    out_ref[...] = out.astype(out_ref.dtype)


def _round_up(x, m):
    return ((x + m - 1) // m) * m


def _choose_batch_tile(B, L, E_pad, H_pad, vmem_budget_bytes=12 * 1024 * 1024):
    """Largest batch tile (multiple of 8, divides B) fitting a VMEM budget, preferring
    >= 2 grid steps so v7x's two TensorCores can both work on the parallel batch axis."""
    # f32 bytes per batch row resident in VMEM: double-buffered emb block, double-
    # buffered out block, plus the fused (L*TB, H) projection and its weighted copy.
    per_row = 4 * (2 * L * E_pad + 2 * H_pad + 2 * L * H_pad)
    fixed = 4 * 2 * (E_pad * H_pad + 2 * H_pad)        # double-buffered weight/bias/att
    cap = max(8, (vmem_budget_bytes - fixed) // max(per_row, 1))
    candidates = [t for t in range(8, B + 1, 8) if B % t == 0 and t <= cap]
    if not candidates:
        return B                                        # tiny/odd batch: one full-batch block is legal
    multi_step = [t for t in candidates if B // t >= 2]
    return max(multi_step) if multi_step else max(candidates)


def multiplex_node_attention(emb, weight, bias, att, *,
                             batch_tile=None, matmul_dtype=jnp.float32):
    """emb: (L, B, E) stacked per-layer embeddings. Returns (B, H) float32."""
    emb = jnp.asarray(emb, jnp.float32)
    weight = jnp.asarray(weight, jnp.float32)
    bias = jnp.reshape(jnp.asarray(bias, jnp.float32), (1, -1))
    att = jnp.reshape(jnp.asarray(att, jnp.float32), (1, -1))

    L, B, E = emb.shape
    E_w, H = weight.shape
    assert E == E_w and bias.shape[1] == H and att.shape[1] == H

    # Zero-pad E and H to lane width (pure layout plumbing; results unchanged).
    E_pad = _round_up(E, 128)
    H_pad = _round_up(H, 128)
    if E_pad != E:
        emb = jnp.pad(emb, ((0, 0), (0, 0), (0, E_pad - E)))
        weight = jnp.pad(weight, ((0, E_pad - E), (0, 0)))
    if H_pad != H:
        weight = jnp.pad(weight, ((0, 0), (0, H_pad - H)))
        bias = jnp.pad(bias, ((0, 0), (0, H_pad - H)))
        att = jnp.pad(att, ((0, 0), (0, H_pad - H)))

    if batch_tile is None:
        batch_tile = _choose_batch_tile(B, L, E_pad, H_pad)
    assert B % batch_tile == 0, "batch must be divisible by batch_tile"
    grid = (B // batch_tile,)

    kernel = functools.partial(_multiplex_attn_kernel,
                               num_layers=L, matmul_dtype=matmul_dtype)

    # NOTE(v7x): the weight/bias/att operands are constant across the grid; on VMEM-tight
    # chips they could additionally use pipeline_mode=pl.Buffered(1) to skip double-buffering.
    out = pl.pallas_call(
        kernel,
        out_shape=jax.ShapeDtypeStruct((B, H_pad), jnp.float32),
        grid_spec=pltpu.PrefetchScalarGridSpec(
            num_scalar_prefetch=0,
            grid=grid,
            in_specs=[
                pl.BlockSpec((L, batch_tile, E_pad), lambda i: (0, i, 0)),
                pl.BlockSpec((E_pad, H_pad), lambda i: (0, 0)),
                pl.BlockSpec((1, H_pad), lambda i: (0, 0)),
                pl.BlockSpec((1, H_pad), lambda i: (0, 0)),
            ],
            out_specs=pl.BlockSpec((batch_tile, H_pad), lambda i: (i, 0)),
        ),
        compiler_params=pltpu.CompilerParams(
            dimension_semantics=("parallel",),
            vmem_limit_bytes=32 * 1024 * 1024,
        ),
    )(emb, weight, bias, att)

    return out[:, :H] if H_pad != H else out


def _reference(emb, weight, bias, att):
    """Plain-JAX reference mirroring the PyTorch forward (dropout p=0 -> identity)."""
    norm = jnp.linalg.norm(emb, axis=-1, keepdims=True)
    e = emb / norm                                              # (L, B, E)
    z = jnp.einsum("lbe,eh->lbh", e, weight)                    # (L, B, H)
    s = jnp.einsum("lbh,h->bl", jnp.tanh(z + bias), att[0])     # (B, L)
    w = jax.nn.softmax(s, axis=-1)                              # (B, L)
    return jnp.einsum("lbh,bl->bh", z, w)                       # (B, H)


def _glorot(key, shape):
    fan_in, fan_out = shape[-2], shape[-1]
    limit = float(np.sqrt(6.0 / (fan_in + fan_out)))
    return jax.random.uniform(key, shape, jnp.float32, -limit, limit)


if __name__ == "__main__":
    # Small shapes consistent with the module: L layers of (B, E) node embeddings.
    # Non-multiples of 128 (E=48, H=40) exercise the lane-padding path.
    L, B, E, H = 3, 32, 48, 40

    key = jax.random.PRNGKey(0)
    k_emb, k_w, k_att = jax.random.split(key, 3)

    emb = jax.random.normal(k_emb, (L, B, E), jnp.float32)   # stacked embeddings list
    weight = _glorot(k_w, (E, H))                            # nn.Parameter (E, H)
    att = _glorot(k_att, (1, H))                             # nn.Parameter (1, H)
    bias = jnp.zeros((1, H), jnp.float32)                    # nn.Parameter (H,), zeros init

    ref = jax.block_until_ready(_reference(emb, weight, bias, att))

    # f32 MXU path (default).
    out = jax.block_until_ready(multiplex_node_attention(emb, weight, bias, att))
    np.testing.assert_allclose(np.asarray(out), np.asarray(ref), rtol=1e-3, atol=1e-3)

    # bf16 MXU operands / f32 accumulate + f32 elementwise (v6e/v7x fast path).
    out_bf16 = jax.block_until_ready(
        multiplex_node_attention(emb, weight, bias, att, matmul_dtype=jnp.bfloat16))
    np.testing.assert_allclose(np.asarray(out_bf16), np.asarray(ref), rtol=3e-2, atol=3e-2)

    print("KERNEL_OK")
</pallas_src>

<mosaic_0001>
module attributes {stable_mosaic.version = 11 : i64} {
  func.func @_multiplex_attn_kernel(%arg0: i32, %arg1: memref<3x16x128xf32, #tpu.memory_space<vmem>>, %arg2: memref<128x128xf32, #tpu.memory_space<vmem>>, %arg3: memref<1x128xf32, #tpu.memory_space<vmem>>, %arg4: memref<1x128xf32, #tpu.memory_space<vmem>>, %arg5: memref<16x128xf32, #tpu.memory_space<vmem>>) attributes {dimension_semantics = [#tpu.dimension_semantics<parallel>], iteration_bounds = array<i64: 2>, scalar_prefetch = 0 : i64, scratch_operands = 0 : i64, tpu.core_type = #tpu.core_type<tc>, window_params = [{transform_indices = @transform_0, window_bounds = array<i64: 3, 16, 128>}, {pipeline_mode = #tpu.pipeline_mode<synchronous>, transform_indices = @transform_1, window_bounds = array<i64: 128, 128>}, {pipeline_mode = #tpu.pipeline_mode<synchronous>, transform_indices = @transform_2, window_bounds = array<i64: 1, 128>}, {pipeline_mode = #tpu.pipeline_mode<synchronous>, transform_indices = @transform_3, window_bounds = array<i64: 1, 128>}, {transform_indices = @transform_4, window_bounds = array<i64: 16, 128>}]} {
    %c0 = arith.constant 0 : index
    %c0_0 = arith.constant 0 : index
    %c0_1 = arith.constant 0 : index
    %0 = vector.load %arg1[%c0, %c0_0, %c0_1] : memref<3x16x128xf32, #tpu.memory_space<vmem>>, vector<3x16x128xf32>
    %1 = arith.mulf %0, %0 : vector<3x16x128xf32>
    %cst = arith.constant dense<0.000000e+00> : vector<3x16xf32>
    %2 = vector.multi_reduction <add>, %1, %cst [2] : vector<3x16x128xf32> to vector<3x16xf32>
    %3 = vector.shape_cast %2 : vector<3x16xf32> to vector<3x16x1xf32>
    %cst_2 = arith.constant 9.99999996E-13 : f32
    %4 = vector.broadcast %cst_2 : f32 to vector<3x16x1xf32>
    %5 = arith.addf %3, %4 : vector<3x16x1xf32>
    %6 = math.rsqrt %5 : vector<3x16x1xf32>
    %7 = vector.broadcast %6 : vector<3x16x1xf32> to vector<3x16x128xf32>
    %8 = arith.mulf %0, %7 : vector<3x16x128xf32>
    %9 = vector.shape_cast %8 : vector<3x16x128xf32> to vector<48x128xf32>
    %c0_3 = arith.constant 0 : index
    %c0_4 = arith.constant 0 : index
    %10 = vector.load %arg2[%c0_3, %c0_4] : memref<128x128xf32, #tpu.memory_space<vmem>>, vector<128x128xf32>
    %cst_5 = arith.constant dense<0.000000e+00> : vector<48x128xf32>
    %11 = tpu.matmul %9, %10, %cst_5 {dimension_numbers = #tpu.dot_dimension_numbers<[1], [0], [0], [1], [0, 0, 1, 1], [], []>} : vector<48x128xf32>, vector<128x128xf32>, vector<48x128xf32> -> vector<48x128xf32>
    %12 = vector.shape_cast %11 : vector<48x128xf32> to vector<3x16x128xf32>
    %c0_6 = arith.constant 0 : index
    %c0_7 = arith.constant 0 : index
    %13 = vector.load %arg3[%c0_6, %c0_7] : memref<1x128xf32, #tpu.memory_space<vmem>>, vector<1x128xf32>
    %c0_8 = arith.constant 0 : index
    %c0_9 = arith.constant 0 : index
    %14 = vector.load %arg4[%c0_8, %c0_9] : memref<1x128xf32, #tpu.memory_space<vmem>>, vector<1x128xf32>
    %15 = vector.shape_cast %13 : vector<1x128xf32> to vector<1x1x128xf32>
    %16 = vector.broadcast %15 : vector<1x1x128xf32> to vector<3x16x128xf32>
    %17 = arith.addf %12, %16 : vector<3x16x128xf32>
    %18 = math.tanh %17 : vector<3x16x128xf32>
    %19 = vector.shape_cast %14 : vector<1x128xf32> to vector<1x1x128xf32>
    %20 = vector.broadcast %19 : vector<1x1x128xf32> to vector<3x16x128xf32>
    %21 = arith.mulf %18, %20 : vector<3x16x128xf32>
    %cst_10 = arith.constant dense<0.000000e+00> : vector<3x16xf32>
    %22 = vector.multi_reduction <add>, %21, %cst_10 [2] : vector<3x16x128xf32> to vector<3x16xf32>
    %23 = vector.shape_cast %22 : vector<3x16xf32> to vector<3x16x1xf32>
    %cst_11 = arith.constant dense<0xFF800000> : vector<16x1xf32>
    %24 = vector.multi_reduction <maximumf>, %23, %cst_11 [0] : vector<3x16x1xf32> to vector<16x1xf32>
    %25 = vector.shape_cast %24 : vector<16x1xf32> to vector<1x16x1xf32>
    %26 = vector.broadcast %25 : vector<1x16x1xf32> to vector<3x16x1xf32>
    %27 = arith.subf %23, %26 : vector<3x16x1xf32>
    %28 = math.exp %27 : vector<3x16x1xf32>
    %cst_12 = arith.constant dense<0.000000e+00> : vector<16x1xf32>
    %29 = vector.multi_reduction <add>, %28, %cst_12 [0] : vector<3x16x1xf32> to vector<16x1xf32>
    %30 = vector.shape_cast %29 : vector<16x1xf32> to vector<1x16x1xf32>
    %31 = tpu.reciprocal %30 {approx = true} : vector<1x16x1xf32> -> vector<1x16x1xf32>
    %32 = arith.mulf %30, %31 : vector<1x16x1xf32>
    %cst_13 = arith.constant 2.000000e+00 : f32
    %33 = vector.broadcast %cst_13 : f32 to vector<1x16x1xf32>
    %34 = arith.subf %33, %32 : vector<1x16x1xf32>
    %35 = arith.mulf %31, %34 : vector<1x16x1xf32>
    %36 = vector.broadcast %35 : vector<1x16x1xf32> to vector<3x16x1xf32>
    %37 = arith.mulf %28, %36 : vector<3x16x1xf32>
    %38 = vector.broadcast %37 : vector<3x16x1xf32> to vector<3x16x128xf32>
    %39 = arith.mulf %12, %38 : vector<3x16x128xf32>
    %cst_14 = arith.constant dense<0.000000e+00> : vector<16x128xf32>
    %40 = vector.multi_reduction <add>, %39, %cst_14 [0] : vector<3x16x128xf32> to vector<16x128xf32>
    %c0_15 = arith.constant 0 : index
    %c0_16 = arith.constant 0 : index
    %41 = vector.load %arg5[%c0_15, %c0_16] : memref<16x128xf32, #tpu.memory_space<vmem>>, vector<16x128xf32>
    tpu.vector_store %arg5[%c0_15, %c0_16], %40 {strides = array<i32>} : memref<16x128xf32, #tpu.memory_space<vmem>>, vector<16x128xf32>,
    return
  }
  func.func @transform_0(%arg0: i32) -> (i32, i32, i32) {
    %c0_i32 = arith.constant 0 : i32
    %c0_i32_0 = arith.constant 0 : i32
    %c0_i32_1 = arith.constant 0 : i32
    return %c0_i32, %arg0, %c0_i32_0 : i32, i32, i32
  }
  func.func @transform_1(%arg0: i32) -> (i32, i32) {
    %c0_i32 = arith.constant 0 : i32
    %c0_i32_0 = arith.constant 0 : i32
    %c0_i32_1 = arith.constant 0 : i32
    return %c0_i32, %c0_i32_0 : i32, i32
  }
  func.func @transform_2(%arg0: i32) -> (i32, i32) {
    %c0_i32 = arith.constant 0 : i32
    %c0_i32_0 = arith.constant 0 : i32
    %c0_i32_1 = arith.constant 0 : i32
    return %c0_i32, %c0_i32_0 : i32, i32
  }
  func.func @transform_3(%arg0: i32) -> (i32, i32) {
    %c0_i32 = arith.constant 0 : i32
    %c0_i32_0 = arith.constant 0 : i32
    %c0_i32_1 = arith.constant 0 : i32
    return %c0_i32, %c0_i32_0 : i32, i32
  }
  func.func @transform_4(%arg0: i32) -> (i32, i32) {
    %c0_i32 = arith.constant 0 : i32
    %c0_i32_0 = arith.constant 0 : i32
    return %arg0, %c0_i32 : i32, i32
  }
}

</mosaic_0001>

<llo_original>
// kernel: tpu_custom_call.1
$region0: #{tpu_custom_call.1}
  #allocation0 [shape = 'u32[]', space=smem, size = 0x4, offset = 0x4, fixed_abs, tag = 'smem constant byte address 0x4 - core index']
  #allocation1 [shape = 'u32[144,128]{1,0:T(1,128)}', space=vmem, size = 0x12000, scoped, tag = 'internal scratch']
  #allocation8 [shape = 's32[]', space=sflag, size = 0x4, offset = 0, fixed_abs, tag = 'sflag constant byte address 0x0 - dummy sync flag']
  %s0 = inlined_call_operand.hbm [shape: f32[3,32,128], index: 0, kind: input, shape index: {}]
  %s1 = inlined_call_operand.hbm [shape: f32[128,128], index: 1, kind: input, shape index: {}]
  %s2 = inlined_call_operand.vmem [shape: f32[1,128], index: 2, kind: input, shape index: {}]
  %s3 = inlined_call_operand.vmem [shape: f32[1,128], index: 3, kind: input, shape index: {}]
  %s4 = inlined_call_operand.hbm [shape: f32[32,128], index: 4, kind: output, shape index: {}]
  %s5 = sld [smem:[#allocation0]]
  $region57: #{tpu_custom_call.1} parent=0
    _
  %s7 = ssub.s32 1, %s5
  %s8 = scalar_select 0, %s7, %s5
  $region1: #{tpu_custom_call.1} parent=0
    #allocation2 [shape = 'u8[49152]{0}', space=vmem, size = 0xc000, scoped, tag = 'input window, operand 0']
    #allocation3 [shape = 's32[2]{0}', space=sflag, size = 0x8, scoped, tag = 'scoped memory for tpu_custom_call.1']
    #allocation4 [shape = 's32[2]{0}', space=sflag, size = 0x8, scoped, tag = 'scoped memory for tpu_custom_call.1']
    #allocation5 [shape = 'u8[65536]{0}', space=vmem, size = 0x10000, scoped, tag = 'input window, operand 1, single buffered']
    #allocation6 [shape = 's32[1]{0}', space=sflag, size = 0x4, scoped, tag = 'scoped memory for tpu_custom_call.1']
    #allocation7 [shape = 'u8[16384]{0}', space=vmem, size = 0x4000, scoped, tag = 'output window, operand 0']
    %9 = vsyncpa [#allocation3], 0
    %s10 = scalar_lea.sflag [#allocation3], 1
    %11 = vsyncpa %s10, 0
    %12 = vsyncpa [#allocation6], 0
    %13 = vsyncpa [#allocation4], 0
    %s14 = scalar_lea.sflag [#allocation4], 1
    %15 = vsyncpa %s14, 0
    loop: start=0, step=1, limit=4
    $region2: #{tpu_custom_call.1} parent=1 // loop_pre_header
      _
    $region3: #{tpu_custom_call.1} parent=1 // loop_header
      %s17 = sphi 0, %s21
      %p18 = scmp.ge.s32.totalorder %s17, 4
      %s27 = sphi 0, %s29
      %s30 = sphi 0, %s27
      %s31 = sphi 0, %s30
      %s47 = sphi 0, %s31
      %s51 = sphi 0, %s51
      %s53 = sphi 0, %s51
      %s54 = sphi 0, %s53
      %s68 = sphi 0, %s54
      %s72 = sphi 0, %s72
      %s74 = sphi 0, %s72
      %s75 = sphi 0, %s74
      %s89 = sphi 0, %s75
      %s93 = sphi 0, %s93
      %s95 = sphi 0, %s93
      %s96 = sphi 0, %s95
      %s110 = sphi 0, %s96
      %s116 = sphi 0, %s118
      %s119 = sphi 0, %s116
      %s120 = sphi 0, %s119
      %s136 = sphi 0, %s120
    $region4: #{tpu_custom_call.1} parent=1 // loop_header_branch
      %20 = sbr.rel (%p18) target = $region8
    $region5: #{tpu_custom_call.1} parent=1 // loop_body
      %s22 = ssub.s32 %s17, 1
      %s23 = ssub.s32 %s17, 2
      %s24 = sadd.s32 %s17, 1
      %s25 = ssub.s32 %s17, %s24
      %p26 = scmp.eq.s32.totalorder %s25, 0
      %s28 = sadd.s32 %s27, 1
      %s29 = scalar_select %p26, %s27, %s28
      %p32 = pneg %p26
      %p33 = scmp.eq.s32.totalorder %s17, 1
      %p34 = por %p32, %p33
      %p35 = scmp.ne.s32.totalorder %s27, %s30
      %p36 = scmp.eq.s32.totalorder %s17, 0
      %p37 = por %p35, %p36
      %p38 = scmp.ne.s32.totalorder %s27, %s30
      %p39 = scmp.eq.s32.totalorder %s22, 1
      %p40 = por %p38, %p39
      %p41 = scmp.ne.s32.totalorder %s30, %s31
      %p42 = scmp.eq.s32.totalorder %s22, 0
      %p43 = por %p41, %p42
      %p44 = scmp.ne.s32.totalorder %s30, %s31
      %p45 = scmp.eq.s32.totalorder %s23, 1
      %p46 = por %p44, %p45
      %p48 = scmp.ne.s32.totalorder %s31, %s47
      %p49 = scmp.eq.s32.totalorder %s23, 0
      %p50 = por %p48, %p49
      %s52 = sadd.s32 %s51, 1
      %p55 = scmp.eq.s32.totalorder %s17, 1
      %p56 = scmp.ne.s32.totalorder %s51, %s53
      %p57 = scmp.eq.s32.totalorder %s17, 0
      %p58 = por %p56, %p57
      %p59 = scmp.ne.s32.totalorder %s51, %s53
      %p60 = scmp.eq.s32.totalorder %s22, 1
      %p61 = por %p59, %p60
      %p62 = scmp.ne.s32.totalorder %s53, %s54
      %p63 = scmp.eq.s32.totalorder %s22, 0
      %p64 = por %p62, %p63
      %p65 = scmp.ne.s32.totalorder %s53, %s54
      %p66 = scmp.eq.s32.totalorder %s23, 1
      %p67 = por %p65, %p66
      %p69 = scmp.ne.s32.totalorder %s54, %s68
      %p70 = scmp.eq.s32.totalorder %s23, 0
      %p71 = por %p69, %p70
      %s73 = sadd.s32 %s72, 1
      %p76 = scmp.eq.s32.totalorder %s17, 1
      %p77 = scmp.ne.s32.totalorder %s72, %s74
      %p78 = scmp.eq.s32.totalorder %s17, 0
      %p79 = por %p77, %p78
      %p80 = scmp.ne.s32.totalorder %s72, %s74
      %p81 = scmp.eq.s32.totalorder %s22, 1
      %p82 = por %p80, %p81
      %p83 = scmp.ne.s32.totalorder %s74, %s75
      %p84 = scmp.eq.s32.totalorder %s22, 0
      %p85 = por %p83, %p84
      %p86 = scmp.ne.s32.totalorder %s74, %s75
      %p87 = scmp.eq.s32.totalorder %s23, 1
      %p88 = por %p86, %p87
      %p90 = scmp.ne.s32.totalorder %s75, %s89
      %p91 = scmp.eq.s32.totalorder %s23, 0
      %p92 = por %p90, %p91
      %s94 = sadd.s32 %s93, 1
      %p97 = scmp.eq.s32.totalorder %s17, 1
      %p98 = scmp.ne.s32.totalorder %s93, %s95
      %p99 = scmp.eq.s32.totalorder %s17, 0
      %p100 = por %p98, %p99
      %p101 = scmp.ne.s32.totalorder %s93, %s95
      %p102 = scmp.eq.s32.totalorder %s22, 1
      %p103 = por %p101, %p102
      %p104 = scmp.ne.s32.totalorder %s95, %s96
      %p105 = scmp.eq.s32.totalorder %s22, 0
      %p106 = por %p104, %p105
      %p107 = scmp.ne.s32.totalorder %s95, %s96
      %p108 = scmp.eq.s32.totalorder %s23, 1
      %p109 = por %p107, %p108
      %p111 = scmp.ne.s32.totalorder %s96, %s110
      %p112 = scmp.eq.s32.totalorder %s23, 0
      %p113 = por %p111, %p112
      %s114 = ssub.s32 %s17, %s24
      %p115 = scmp.eq.s32.totalorder %s114, 0
      %s117 = sadd.s32 %s116, 1
      %s118 = scalar_select %p115, %s116, %s117
      %p121 = pneg %p115
      %p122 = scmp.eq.s32.totalorder %s17, 1
      %p123 = por %p121, %p122
      %p124 = scmp.ne.s32.totalorder %s116, %s119
      %p125 = scmp.eq.s32.totalorder %s17, 0
      %p126 = por %p124, %p125
      %p127 = scmp.ne.s32.totalorder %s116, %s119
      %p128 = scmp.eq.s32.totalorder %s22, 1
      %p129 = por %p127, %p128
      %p130 = scmp.ne.s32.totalorder %s119, %s120
      %p131 = scmp.eq.s32.totalorder %s22, 0
      %p132 = por %p130, %p131
      %p133 = scmp.ne.s32.totalorder %s119, %s120
      %p134 = scmp.eq.s32.totalorder %s23, 1
      %p135 = por %p133, %p134
      %p137 = scmp.ne.s32.totalorder %s120, %s136
      %p138 = scmp.eq.s32.totalorder %s23, 0
      %p139 = por %p137, %p138
      %p140 = scmp.le.s32.totalorder 1, %s17
      %p141 = scmp.lt.s32.totalorder %s17, 3
      %p142 = pnand %p140, %p141
      %p143 = pneg %p142
      // Predicated region
      $region9: #{tpu_custom_call.1} parent=5 // pred_check
        _
      $region10: #{tpu_custom_call.1} parent=5 // pred_check_branch
        %145 = sbr.rel (%p142) target = $region12
      $region11: #{tpu_custom_call.1} parent=5 // pred_region
        %s146 = ssub.s32 %s17, 1
        // Predicated region
        $region13: #{tpu_custom_call.1} parent=11 // pred_check
          %p147 = pneg %p64
        $region14: #{tpu_custom_call.1} parent=11 // pred_check_branch
          %149 = sbr.rel (%p147) target = $region16
        $region15: #{tpu_custom_call.1} parent=11 // pred_region
          %s151 = ssub.s32 2048, 2048
          %152 = vsyncadd [#allocation6], %s151
          %s153 = sshll.u32 [#allocation5], 4
          %s154 = int_to_ptr.vmem [resolvable:$true] %s153
          %159 = dma.hbm_to_vmem [thread:$0]  %s1, 2048, %s154, [#allocation6], 128, 128, 8
        $region16: #{tpu_custom_call.1} parent=11 // pred_fallthru
          _
        // Predicated region
        $region17: #{tpu_custom_call.1} parent=11 // pred_check
          %p160 = pneg %p85
        $region18: #{tpu_custom_call.1} parent=11 // pred_check_branch
          %162 = sbr.rel (%p160) target = $region20
        $region19: #{tpu_custom_call.1} parent=11 // pred_region
          _
        $region20: #{tpu_custom_call.1} parent=11 // pred_fallthru
          _
        // Predicated region
        $region21: #{tpu_custom_call.1} parent=11 // pred_check
          %p163 = pneg %p106
        $region22: #{tpu_custom_call.1} parent=11 // pred_check_branch
          %165 = sbr.rel (%p163) target = $region24
        $region23: #{tpu_custom_call.1} parent=11 // pred_region
          _
        $region24: #{tpu_custom_call.1} parent=11 // pred_fallthru
          _
      $region12: #{tpu_custom_call.1} parent=5 // pred_fallthru
        _
      %p166 = scmp.lt.s32.totalorder %s17, 2
      // Predicated region
      $region25: #{tpu_custom_call.1} parent=5 // pred_check
        %p167 = pneg %p166
      $region26: #{tpu_custom_call.1} parent=5 // pred_check_branch
        %169 = sbr.rel (%p167) target = $region28
      $region27: #{tpu_custom_call.1} parent=5 // pred_region
        // Predicated region
        $region29: #{tpu_custom_call.1} parent=27 // pred_check
          %p170 = pneg %p37
        $region30: #{tpu_custom_call.1} parent=27 // pred_check_branch
          %172 = sbr.rel (%p170) target = $region32
        $region31: #{tpu_custom_call.1} parent=27 // pred_region
          #allocation9 [shape = 'u32[6]{0}', space=smem, size = 0x18, scoped, tag = 'DMA stride descriptor']
          %s173 = sand.u32 %s27, 1
          %s174 = scalar_lea.sflag [#allocation3], %s173
          %s175 = sand.u32 %s27, 1
          %s176 = smul.addr %s175, 48
          %s177 = scalar_lea.vmem [#allocation2], %s176
          %s178 = smul.u32 2, %s17
          %s180 = ssub.s32 768, 768
          %181 = vsyncadd %s174, %s180
          %s182 = smul.addr %s178, 128
          %s183 = scalar_lea.hbm %s0, %s182
          %s185 = sshll.u32 1, 14
          %s186 = sxor.u32 4294967295, %s185
          %s188 = sld [smem:[#allocation0]]
          %s189 = sadd.s32 2, %s188
          %s191 = sshll.u32 7, 26
          %s192 = sxor.u32 4294967295, %s191
          %s193 = sand.u32 0, %s192
          %s194 = sshll.u32 %s189, 26
          %s195 = sor.u32 %s193, %s194
          %s196 = sshll.u32 %s177, 4
          %s197 = int_to_ptr.vmem [resolvable:$true] %s196
          %203 = sst [smem:[#allocation9]] 512
          %s204 = scalar_lea.smem [#allocation9], 1
          %205 = sst [smem:[%s204]] 256
          %s206 = scalar_lea.smem [#allocation9], 2
          %207 = sst [smem:[%s206]] 2
          %s208 = scalar_lea.smem [#allocation9], 3
          %209 = sst [smem:[%s208]] 128
          %s210 = scalar_lea.smem [#allocation9], 4
          %211 = sst [smem:[%s210]] 128
          %s212 = scalar_lea.smem [#allocation9], 5
          %213 = sst [smem:[%s212]] 8
          %215 = dma.general %s183, 768, %s197, %s174, 131072, [#allocation9], %s195, 0
        $region32: #{tpu_custom_call.1} parent=27 // pred_fallthru
          _
      $region28: #{tpu_custom_call.1} parent=5 // pred_fallthru
        _
      %p216 = scmp.le.s32.totalorder 1, %s17
      %p217 = scmp.lt.s32.totalorder %s17, 3
      %p218 = pnand %p216, %p217
      %p219 = pneg %p218
      // Predicated region
      $region33: #{tpu_custom_call.1} parent=5 // pred_check
        _
      $region34: #{tpu_custom_call.1} parent=5 // pred_check_branch
        %221 = sbr.rel (%p218) target = $region36
      $region35: #{tpu_custom_call.1} parent=5 // pred_region
        %s222 = ssub.s32 %s17, 1
        %s223 = sand.u32 %s30, 1
        %s224 = scalar_lea.sflag [#allocation3], %s223
        %s225 = sand.u32 %s30, 1
        %s226 = smul.addr %s225, 48
        %s227 = scalar_lea.vmem [#allocation2], %s226
        // Predicated region
        $region37: #{tpu_custom_call.1} parent=35 // pred_check
          %p228 = pneg %p43
        $region38: #{tpu_custom_call.1} parent=35 // pred_check_branch
          %230 = sbr.rel (%p228) target = $region40
        $region39: #{tpu_custom_call.1} parent=35 // pred_region
          %231 = dma.done %s224, 768
        $region40: #{tpu_custom_call.1} parent=35 // pred_fallthru
          _
        // Predicated region
        $region41: #{tpu_custom_call.1} parent=35 // pred_check
          %p232 = pneg %p64
        $region42: #{tpu_custom_call.1} parent=35 // pred_check_branch
          %234 = sbr.rel (%p232) target = $region44
        $region43: #{tpu_custom_call.1} parent=35 // pred_region
          %235 = dma.done [#allocation6], 2048
        $region44: #{tpu_custom_call.1} parent=35 // pred_fallthru
          _
        %s236 = sand.u32 %s30, 1
        %s237 = scalar_lea.sflag [#allocation3], %s236
        %s238 = sand.u32 %s30, 1
        %s239 = smul.addr %s238, 48
        %s240 = scalar_lea.vmem [#allocation2], %s239
        %p241 = pneg %p43
        %p242 = pneg %p40
        %p243 = pneg %p64
        %p244 = pneg %p61
        %p245 = pneg %p85
        %p246 = pneg %p82
        %p247 = pneg %p106
        %p248 = pneg %p103
        %p249 = pneg %p132
        %p250 = pneg %p129
        %s251 = sand.u32 %s119, 1
        %s252 = scalar_lea.sflag [#allocation4], %s251
        %s253 = sand.u32 %s119, 1
        %s254 = smul.addr %s253, 16
        %s255 = scalar_lea.vmem [#allocation7], %s254
        %s256 = smul.u32 2, %s22
        %s257 = smul.u32 2, %s22
        %v258 = vld [vmem:[%s227] sm:$0xff]
        %v259 = vld [vmem:[%s227 + $0x8] sm:$0xff]
        %v260 = vld [vmem:[%s227 + $0x10] sm:$0xff]
        %v261 = vld [vmem:[%s227 + $0x18] sm:$0xff]
        %v262 = vld [vmem:[%s227 + $0x20] sm:$0xff]
        %v263 = vld [vmem:[%s227 + $0x28] sm:$0xff]
        %v264 = vmul.f32 %v258, %v258
        %v265 = vmul.f32 %v259, %v259
        %v266 = vmul.f32 %v260, %v260
        %v267 = vmul.f32 %v261, %v261
        %v268 = vmul.f32 %v262, %v262
        %v269 = vmul.f32 %v263, %v263
        %270 = vadd.xlane.f32.xlu0 %v264
        %v271 = vpop.xlane.xlu0 %270
        %272 = vadd.xlane.f32.xlu0 %v265
        %v273 = vpop.xlane.xlu0 %272
        %274 = vadd.xlane.f32.xlu0 %v266
        %v275 = vpop.xlane.xlu0 %274
        %276 = vadd.xlane.f32.xlu0 %v267
        %v277 = vpop.xlane.xlu0 %276
        %278 = vadd.xlane.f32.xlu0 %v268
        %v279 = vpop.xlane.xlu0 %278
        %280 = vadd.xlane.f32.xlu0 %v269
        %v281 = vpop.xlane.xlu0 %280
        %v282 = vadd.f32 %v271, 1e-12
        %v283 = vadd.f32 %v273, 1e-12
        %v284 = vadd.f32 %v275, 1e-12
        %v285 = vadd.f32 %v277, 1e-12
        %v286 = vadd.f32 %v279, 1e-12
        %v287 = vadd.f32 %v281, 1e-12
        %v288 = vrsqrt.pop %v282
        %v289 = vrsqrt.pop %v283
        %v290 = vrsqrt.pop %v284
        %v291 = vrsqrt.pop %v285
        %v292 = vrsqrt.pop %v286
        %v293 = vrsqrt.pop %v287
        %v294 = vmul.f32 %v258, %v288
        %v295 = vmul.f32 %v259, %v289
        %v296 = vmul.f32 %v260, %v290
        %v297 = vmul.f32 %v261, %v291
        %v298 = vmul.f32 %v262, %v292
        %v299 = vmul.f32 %v263, %v293
        %v300 = vld [vmem:[#allocation5] sm:$0xff]
        %v301 = vld [vmem:[#allocation5 + $0x8] sm:$0xff]
        %v302 = vld [vmem:[#allocation5 + $0x10] sm:$0xff]
        %v303 = vld [vmem:[#allocation5 + $0x18] sm:$0xff]
        %v304 = vld [vmem:[#allocation5 + $0x20] sm:$0xff]
        %v305 = vld [vmem:[#allocation5 + $0x28] sm:$0xff]
        %v306 = vld [vmem:[#allocation5 + $0x30] sm:$0xff]
        %v307 = vld [vmem:[#allocation5 + $0x38] sm:$0xff]
        %v308 = vld [vmem:[#allocation5 + $0x40] sm:$0xff]
        %v309 = vld [vmem:[#allocation5 + $0x48] sm:$0xff]
        %v310 = vld [vmem:[#allocation5 + $0x50] sm:$0xff]
        %v311 = vld [vmem:[#allocation5 + $0x58] sm:$0xff]
        %v312 = vld [vmem:[#allocation5 + $0x60] sm:$0xff]
        %v313 = vld [vmem:[#allocation5 + $0x68] sm:$0xff]
        %v314 = vld [vmem:[#allocation5 + $0x70] sm:$0xff]
        %v315 = vld [vmem:[#allocation5 + $0x78] sm:$0xff]
        %316 = vmatprep.subr.mxu0 0.0
        %317 = vmatpush1.msra.mxu0 %v315
        %318 = vmatprep.subr.mxu0 0.0
        %319 = vmatpush1.msra.mxu0 %v314
        %320 = vmatprep.subr.mxu0 0.0
        %321 = vmatpush1.msra.mxu0 %v313
        %322 = vmatprep.subr.mxu0 0.0
        %323 = vmatpush1.msra.mxu0 %v312
        %324 = vmatprep.subr.mxu0 0.0
        %325 = vmatpush1.msra.mxu0 %v311
        %326 = vmatprep.subr.mxu0 0.0
        %327 = vmatpush1.msra.mxu0 %v310
        %328 = vmatprep.subr.mxu0 0.0
        %329 = vmatpush1.msra.mxu0 %v309
        %330 = vmatprep.subr.mxu0 0.0
        %331 = vmatpush1.msra.mxu0 %v308
        %332 = vmatprep.subr.mxu0 0.0
        %333 = vmatpush1.msra.mxu0 %v307
        %334 = vmatprep.subr.mxu0 0.0
        %335 = vmatpush1.msra.mxu0 %v306
        %336 = vmatprep.subr.mxu0 0.0
        %337 = vmatpush1.msra.mxu0 %v305
        %338 = vmatprep.subr.mxu0 0.0
        %339 = vmatpush1.msra.mxu0 %v304
        %340 = vmatprep.subr.mxu0 0.0
        %341 = vmatpush1.msra.mxu0 %v303
        %342 = vmatprep.subr.mxu0 0.0
        %343 = vmatpush1.msra.mxu0 %v302
        %344 = vmatprep.subr.mxu0 0.0
        %345 = vmatpush1.msra.mxu0 %v301
        %346 = vmatprep.subr.mxu0 0.0
        %347 = vmatpush1.msra.mxu0 %v300
        %348 = vmatprep.subr.mxu0 0.0
        %349 = vmatpush2.msra.mxu0 0.0
        %350 = vmatprep.subr.mxu0 0.0
        %351 = vmatpush2.msra.mxu0 0.0
        %352 = vmatprep.subr.mxu0 0.0
        %353 = vmatpush2.msra.mxu0 0.0
        %354 = vmatprep.subr.mxu0 0.0
        %355 = vmatpush2.msra.mxu0 0.0
        %356 = vmatprep.subr.mxu0 0.0
        %357 = vmatpush2.msra.mxu0 0.0
        %358 = vmatprep.subr.mxu0 0.0
        %359 = vmatpush2.msra.mxu0 0.0
        %360 = vmatprep.subr.mxu0 0.0
        %361 = vmatpush2.msra.mxu0 0.0
        %362 = vmatprep.subr.mxu0 0.0
        %363 = vmatpush2.msra.mxu0 0.0
        %364 = vmatprep.subr.mxu0 0.0
        %365 = vmatpush2.msra.mxu0 0.0
        %366 = vmatprep.subr.mxu0 0.0
        %367 = vmatpush2.msra.mxu0 0.0
        %368 = vmatprep.subr.mxu0 0.0
        %369 = vmatpush2.msra.mxu0 0.0
        %370 = vmatprep.subr.mxu0 0.0
        %371 = vmatpush2.msra.mxu0 0.0
        %372 = vmatprep.subr.mxu0 0.0
        %373 = vmatpush2.msra.mxu0 0.0
        %374 = vmatprep.subr.mxu0 0.0
        %375 = vmatpush2.msra.mxu0 0.0
        %376 = vmatprep.subr.mxu0 0.0
        %377 = vmatpush2.msra.mxu0 0.0
        %378 = vmatprep.subr.mxu0 0.0
        %379 = vmatpush2.msra.mxu0 0.0
        %380 = vmatprep.mubr.f32.mxu0 0.0
        %381 = vmatmul.mubr.f32.gmra.mxu0 %v294
        %v382 = vpop.f32.mrf.mxu0
        %v383 = vadd.f32 0.0, %v382
        %v384 = vpop.f32.mrf.mxu0
        %385 = vmatprep.mubr.f32.mxu0 0.0
        %386 = vmatmul.mubr.f32.gmra.mxu0 %v295
        %v387 = vpop.f32.mrf.mxu0
        %v388 = vadd.f32 0.0, %v387
        %v389 = vpop.f32.mrf.mxu0
        %390 = vmatprep.mubr.f32.mxu0 0.0
        %391 = vmatmul.mubr.f32.gmra.mxu0 %v296
        %v392 = vpop.f32.mrf.mxu0
        %v393 = vadd.f32 0.0, %v392
        %v394 = vpop.f32.mrf.mxu0
        %395 = vmatprep.mubr.f32.mxu0 0.0
        %396 = vmatmul.mubr.f32.gmra.mxu0 %v297
        %v397 = vpop.f32.mrf.mxu0
        %v398 = vadd.f32 0.0, %v397
        %v399 = vpop.f32.mrf.mxu0
        %400 = vmatprep.mubr.f32.mxu0 0.0
        %401 = vmatmul.mubr.f32.gmra.mxu0 %v298
        %v402 = vpop.f32.mrf.mxu0
        %v403 = vadd.f32 0.0, %v402
        %v404 = vpop.f32.mrf.mxu0
        %405 = vmatprep.mubr.f32.mxu0 0.0
        %406 = vmatmul.mubr.f32.gmra.mxu0 %v299
        %v407 = vpop.f32.mrf.mxu0
        %v408 = vadd.f32 0.0, %v407
        %v409 = vpop.f32.mrf.mxu0
        %410 = vdwg.mxu0
        %v411 = vld [vmem:[%s2] sm:$0x1]
        %v412 = vld [vmem:[%s3] sm:$0x1]
        %v414 = vlaneseq
        %v415 = vshrl.u32 %v414, 7
        %v416 = vsub.s32 0, %v415
        %v417 = vrot.slane %v411, %v416
        %v419 = vadd.f32 %v383, %v417
        %v420 = vadd.f32 %v388, %v417
        %v421 = vadd.f32 %v393, %v417
        %v422 = vadd.f32 %v398, %v417
        %v423 = vadd.f32 %v403, %v417
        %v424 = vadd.f32 %v408, %v417
        %v425 = vtanh.pop %v419
        %v426 = vtanh.pop %v420
        %v427 = vtanh.pop %v421
        %v428 = vtanh.pop %v422
        %v429 = vtanh.pop %v423
        %v430 = vtanh.pop %v424
        %v432 = vlaneseq
        %v433 = vshrl.u32 %v432, 7
        %v434 = vsub.s32 0, %v433
        %v435 = vrot.slane %v412, %v434
        %v437 = vmul.f32 %v425, %v435
        %v438 = vmul.f32 %v426, %v435
        %v439 = vmul.f32 %v427, %v435
        %v440 = vmul.f32 %v428, %v435
        %v441 = vmul.f32 %v429, %v435
        %v442 = vmul.f32 %v430, %v435
        %443 = vadd.xlane.f32.xlu0 %v437
        %v444 = vpop.xlane.xlu0 %443
        %445 = vadd.xlane.f32.xlu0 %v438
        %v446 = vpop.xlane.xlu0 %445
        %447 = vadd.xlane.f32.xlu0 %v439
        %v448 = vpop.xlane.xlu0 %447
        %449 = vadd.xlane.f32.xlu0 %v440
        %v450 = vpop.xlane.xlu0 %449
        %451 = vadd.xlane.f32.xlu0 %v441
        %v452 = vpop.xlane.xlu0 %451
        %453 = vadd.xlane.f32.xlu0 %v442
        %v454 = vpop.xlane.xlu0 %453
        %v455 = vmax.f32 %v444, %v452
        %v456 = vmax.f32 %v455, %v448
        %v457 = vmax.f32 %v446, %v454
        %v458 = vmax.f32 %v457, %v450
        %v459 = vsub.f32 %v444, %v456
        %v460 = vsub.f32 %v446, %v458
        %v461 = vsub.f32 %v448, %v456
        %v462 = vsub.f32 %v450, %v458
        %v463 = vsub.f32 %v452, %v456
        %v464 = vsub.f32 %v454, %v458
        %v465 = vmul.f32 %v459, 1.442695
        %v466 = vpow.pop %v465
        %v467 = vmul.f32 %v460, 1.442695
        %v468 = vpow.pop %v467
        %v469 = vmul.f32 %v461, 1.442695
        %v470 = vpow.pop %v469
        %v471 = vmul.f32 %v462, 1.442695
        %v472 = vpow.pop %v471
        %v473 = vmul.f32 %v463, 1.442695
        %v474 = vpow.pop %v473
        %v475 = vmul.f32 %v464, 1.442695
        %v476 = vpow.pop %v475
        %v477 = vadd.f32 %v466, %v470
        %v478 = vadd.f32 %v477, %v474
        %v479 = vadd.f32 %v468, %v472
        %v480 = vadd.f32 %v479, %v476
        %v481 = vrcp.pop %v478
        %v482 = vrcp.pop %v480
        %v483 = vmul.f32 %v478, %v481
        %v484 = vmul.f32 %v480, %v482
        %v485 = vsub.f32 2.0, %v483
        %v486 = vsub.f32 2.0, %v484
        %v487 = vmul.f32 %v481, %v485
        %v488 = vmul.f32 %v482, %v486
        %v489 = vmul.f32 %v466, %v487
        %v490 = vmul.f32 %v468, %v488
        %v491 = vmul.f32 %v470, %v487
        %v492 = vmul.f32 %v472, %v488
        %v493 = vmul.f32 %v474, %v487
        %v494 = vmul.f32 %v476, %v488
        %v495 = vmul.f32 %v383, %v489
        %v496 = vmul.f32 %v388, %v490
        %v497 = vmul.f32 %v393, %v491
        %v498 = vmul.f32 %v398, %v492
        %v499 = vmul.f32 %v403, %v493
        %v500 = vmul.f32 %v408, %v494
        %v501 = vadd.f32 %v495, %v497
        %v502 = vadd.f32 %v501, %v499
        %v503 = vadd.f32 %v496, %v498
        %v504 = vadd.f32 %v503, %v500
        %505 = vst [vmem:[%s255] sm:$0xff] %v502
        %506 = vst [vmem:[%s255 + $0x8] sm:$0xff] %v504
        %s507 = sand.u32 %s119, 1
        %s508 = scalar_lea.sflag [#allocation4], %s507
        %s509 = sand.u32 %s119, 1
        %s510 = smul.addr %s509, 16
        %s511 = scalar_lea.vmem [#allocation7], %s510
        // Predicated region
        $region45: #{tpu_custom_call.1} parent=35 // pred_check
          %p512 = pneg %p129
        $region46: #{tpu_custom_call.1} parent=35 // pred_check_branch
          %514 = sbr.rel (%p512) target = $region48
        $region47: #{tpu_custom_call.1} parent=35 // pred_region
          %s515 = smul.u32 2, %s22
          %s517 = ssub.s32 256, 256
          %518 = vsyncadd %s508, %s517
          %s519 = smul.addr %s515, 128
          %s520 = scalar_lea.hbm %s4, %s519
          %s521 = sshll.u32 %s511, 4
          %s522 = int_to_ptr.vmem [resolvable:$true] %s521
          %527 = dma.vmem_to_hbm [thread:$0]  %s522, 256, %s520, %s508, 128, 128, 8
        $region48: #{tpu_custom_call.1} parent=35 // pred_fallthru
          _
      $region36: #{tpu_custom_call.1} parent=5 // pred_fallthru
        _
      %p528 = scmp.le.s32.totalorder 2, %s17
      // Predicated region
      $region49: #{tpu_custom_call.1} parent=5 // pred_check
        %p529 = pneg %p528
      $region50: #{tpu_custom_call.1} parent=5 // pred_check_branch
        %531 = sbr.rel (%p529) target = $region52
      $region51: #{tpu_custom_call.1} parent=5 // pred_region
        %s532 = ssub.s32 %s17, 2
        // Predicated region
        $region53: #{tpu_custom_call.1} parent=51 // pred_check
          %p533 = pneg %p135
        $region54: #{tpu_custom_call.1} parent=51 // pred_check_branch
          %535 = sbr.rel (%p533) target = $region56
        $region55: #{tpu_custom_call.1} parent=51 // pred_region
          %s536 = sand.u32 %s120, 1
          %s537 = scalar_lea.sflag [#allocation4], %s536
          %s538 = sand.u32 %s120, 1
          %s539 = smul.addr %s538, 16
          %s540 = scalar_lea.vmem [#allocation7], %s539
          %541 = dma.done %s537, 256
        $region56: #{tpu_custom_call.1} parent=51 // pred_fallthru
          _
      $region52: #{tpu_custom_call.1} parent=5 // pred_fallthru
        _
    $region6: #{tpu_custom_call.1} parent=1 // loop_footer
      %s21 = sadd.s32 1, %s17
    $region7: #{tpu_custom_call.1} parent=1 // loop_footer_branch
      %16 = sbr.rel target = $region3
    $region8: #{tpu_custom_call.1} parent=1 // loop_exit
      _
    %542 = vsyncpa [#allocation3], 1
    %s543 = scalar_lea.sflag [#allocation3], 1
    %544 = vsyncpa %s543, 1
    %545 = vsyncpa [#allocation6], 1
    %546 = vsyncpa [#allocation4], 1
    %s547 = scalar_lea.sflag [#allocation4], 1
    %548 = vsyncpa %s547, 1

</llo_original>
